<compile_context>
chip_gen: v6e
topology: v6e:2x2x1
jax: 0.10.0
libtpu: 0.0.40
codegen_flags: <defaults>
</compile_context>

<pallas_src>
import jax
import jax.numpy as jnp
from jax import lax
from jax.experimental import pallas as pl
from jax.experimental.pallas import tpu as pltpu


def conv_relu_stats_kernel(x_ref, wt_ref, bias_ref, y_ref, stats_ref, xh_scr):
    # x_ref    : (TB, H, W*Cin)       bf16  TB batch elements, W/Cin flat on lanes
    # wt_ref   : (3*W*Cin, W*Cout)    bf16  Toeplitz-expanded weights, kh-major K
    # bias_ref : (1, W*Cout)          f32   conv bias tiled along W
    # y_ref    : (TB, H, W*Cout)      bf16  conv + bias + ReLU
    # stats_ref: (1, 2, W*Cout)       f32   [sum; sum-of-squares] over this tile
    # xh_scr   : (TB*H + 2, W*Cin)    bf16  row-halo staging buffer
    TB, H, wcin = x_ref.shape
    M = TB * H
    wcout = y_ref.shape[2]

    # Stage the tile once with a zero row above and below (height halo). The
    # width zero-padding is folded into the Toeplitz weight, so it is free.
    x = x_ref[...].reshape(M, wcin)
    zero_row = jnp.zeros((1, wcin), dtype=xh_scr.dtype)
    xh_scr[0:1, :] = zero_row
    xh_scr[M + 1:M + 2, :] = zero_row
    xh_scr[1:M + 1, :] = x

    x_up = xh_scr[0:M, :]        # row r -> x[r-1]  (zero at the global first row)
    x_dn = xh_scr[2:M + 2, :]    # row r -> x[r+1]  (zero at the global last row)

    if TB > 1:
        # Rows of different batch elements are stacked along M; zero the taps
        # that would otherwise leak across a batch-element boundary.
        row = lax.broadcasted_iota(jnp.int32, (M, 1), 0)
        x_up = jnp.where(row % H == 0, jnp.zeros_like(x_up), x_up)
        x_dn = jnp.where(row % H == H - 1, jnp.zeros_like(x_dn), x_dn)

    # Single MXU matmul: M = TB*H, K = 3*W*Cin, N = W*Cout (lane-dense),
    # accumulated in f32.
    xcat = jnp.concatenate([x_up, x, x_dn], axis=1)            # (M, 3*W*Cin)
    acc = jnp.dot(xcat, wt_ref[...], preferred_element_type=jnp.float32)
    y = jnp.maximum(acc + bias_ref[...], 0.0)                  # bias + ReLU, f32

    # bf16 intermediate for HBM traffic; BN statistics from the f32 value.
    y_ref[...] = y.reshape(TB, H, wcout).astype(y_ref.dtype)
    stats_ref[0] = jnp.concatenate(
        [jnp.sum(y, axis=0, keepdims=True),
         jnp.sum(y * y, axis=0, keepdims=True)], axis=0)


def _toeplitz_weight(w, W):
    """Expand HWIO 3x3 weights to (KH, W*Cin, W*Cout), folding the W taps and
    the implicit width zero-padding into the contraction."""
    KH, KW, Cin, Cout = w.shape
    idx = jnp.arange(W)[:, None] + jnp.arange(KW)[None, :] - 1      # (W, KW)
    ind = jax.nn.one_hot(idx, W, dtype=jnp.float32)                 # zero row => pad tap
    wt = jnp.einsum("wkp,hkio->hpiwo", ind, w.astype(jnp.float32))  # (KH, W, Cin, W, Cout)
    return wt.reshape(KH, W * Cin, W * Cout)


def _pick_batch_tile(B, H, target_m=256):
    """Largest batch tile with TB*H <= target_m, B % TB == 0, and (when
    possible) at least two grid steps so v7x's two TensorCores both work."""
    tb = max(1, min(B, max(1, target_m // H)))
    while tb > 1 and (B % tb != 0 or B // tb < 2):
        tb -= 1
    return tb


@jax.jit
def conv_block_forward(x_nchw, w, b, gamma, beta, eps=1e-5):
    """x_nchw: (B, Cin, H, W); w: (3, 3, Cin, Cout) HWIO; b/gamma/beta: (Cout,)."""
    B, Cin, H, W = x_nchw.shape
    KH, KW, _, Cout = w.shape
    WCin, WCout = W * Cin, W * Cout

    TB = _pick_batch_tile(B, H)
    num_tiles = B // TB

    # NCHW -> (B, H, W*Cin): channels fastest on the lane axis, bf16 for the MXU.
    x_flat = (jnp.transpose(x_nchw, (0, 2, 3, 1))
              .reshape(B, H, WCin).astype(jnp.bfloat16))
    wt = _toeplitz_weight(w, W).reshape(KH * WCin, WCout).astype(jnp.bfloat16)
    bias_t = jnp.tile(b.astype(jnp.float32), W).reshape(1, WCout)

    # ---- Fused Pallas pass: conv + bias + ReLU + partial BN statistics -----
    y_bf16, stats = pl.pallas_call(
        conv_relu_stats_kernel,
        out_shape=(
            jax.ShapeDtypeStruct((B, H, WCout), jnp.bfloat16),
            jax.ShapeDtypeStruct((num_tiles, 2, WCout), jnp.float32),
        ),
        grid=(num_tiles,),
        in_specs=[
            pl.BlockSpec((TB, H, WCin), lambda i: (i, 0, 0)),
            pl.BlockSpec((KH * WCin, WCout), lambda i: (0, 0)),
            pl.BlockSpec((1, WCout), lambda i: (0, 0)),
        ],
        out_specs=(
            pl.BlockSpec((TB, H, WCout), lambda i: (i, 0, 0)),
            pl.BlockSpec((1, 2, WCout), lambda i: (i, 0, 0)),
        ),
        scratch_shapes=[pltpu.VMEM((TB * H + 2, WCin), jnp.bfloat16)],
        compiler_params=pltpu.CompilerParams(
            dimension_semantics=("parallel",)),
    )(x_flat, wt, bias_t)

    # ---- Tiny cross-tile combine (per-channel mean / inv_std) in XLA -------
    n = B * H * W
    s = stats[:, 0, :].reshape(num_tiles, W, Cout).sum(axis=(0, 1))
    ss = stats[:, 1, :].reshape(num_tiles, W, Cout).sum(axis=(0, 1))
    mean = s / n
    var = jnp.maximum(ss / n - mean * mean, 0.0)        # biased variance
    inv_std = lax.rsqrt(var + eps)
    scale = gamma.astype(jnp.float32) * inv_std
    shift = beta.astype(jnp.float32) - mean * scale

    # ---- BN apply fused with the NHWC -> NCHW transpose in XLA -------------
    # (single read of the bf16 activations, single write of the f32 output)
    y4 = y_bf16.reshape(B, H, W, Cout).astype(jnp.float32)
    return jnp.transpose(y4 * scale + shift, (0, 3, 1, 2))


def reference_forward(x_nchw, w, b, gamma, beta, eps=1e-5):
    """Pure-JAX reference (bf16-input conv -> relu -> batchnorm, batch stats)."""
    x = jnp.transpose(x_nchw, (0, 2, 3, 1))
    y = lax.conv_general_dilated(
        x.astype(jnp.bfloat16), w.astype(jnp.bfloat16),
        window_strides=(1, 1), padding=((1, 1), (1, 1)),
        dimension_numbers=("NHWC", "HWIO", "NHWC"),
        preferred_element_type=jnp.float32,
    ) + b.reshape(1, 1, 1, -1)
    y = jnp.maximum(y, 0.0)
    mean = jnp.mean(y, axis=(0, 1, 2), keepdims=True)
    var = jnp.mean((y - mean) ** 2, axis=(0, 1, 2), keepdims=True)
    out = (y - mean) * lax.rsqrt(var + eps) * gamma.reshape(1, 1, 1, -1) \
        + beta.reshape(1, 1, 1, -1)
    return jnp.transpose(out, (0, 3, 1, 2))


if __name__ == "__main__":
    key = jax.random.PRNGKey(0)
    k_x, k_w, k_b, k_g, k_bt, k_x2 = jax.random.split(key, 6)

    B, Cin, H, W = 2, 4, 16, 16
    Cout, K = 8, 3

    x = jax.random.normal(k_x, (B, Cin, H, W), dtype=jnp.float32)

    # Deterministic synthetic parameters (shapes match nn.Conv2d / nn.BatchNorm2d).
    fan_in = Cin * K * K
    bound = 1.0 / (fan_in ** 0.5)
    w = jax.random.uniform(k_w, (K, K, Cin, Cout), minval=-bound, maxval=bound,
                           dtype=jnp.float32)                 # HWIO conv weight
    b = jax.random.uniform(k_b, (Cout,), minval=-bound, maxval=bound,
                           dtype=jnp.float32)
    gamma = jnp.ones((Cout,), jnp.float32) \
        + 0.1 * jax.random.normal(k_g, (Cout,), dtype=jnp.float32)
    beta = 0.1 * jax.random.normal(k_bt, (Cout,), dtype=jnp.float32)

    # Tolerance note: the conv+ReLU intermediate is stored in bf16 (perf
    # review item); the resulting rounding after BN normalization is ~1e-2,
    # so compare at 2e-2 against the f32-activation reference.
    out = conv_block_forward(x, w, b, gamma, beta)
    jax.block_until_ready(out)
    ref = reference_forward(x, w, b, gamma, beta)
    assert out.shape == (B, Cout, H, W)
    assert jnp.allclose(out, ref, atol=2e-2, rtol=2e-2)

    # Second check at a larger batch: exercises batch-blocked tiles (TB > 1)
    # and the intra-tile batch-boundary masking of the conv taps.
    B2 = 8
    x2 = jax.random.normal(k_x2, (B2, Cin, H, W), dtype=jnp.float32)
    out2 = conv_block_forward(x2, w, b, gamma, beta)
    jax.block_until_ready(out2)
    ref2 = reference_forward(x2, w, b, gamma, beta)
    assert out2.shape == (B2, Cout, H, W)
    assert jnp.allclose(out2, ref2, atol=2e-2, rtol=2e-2)

    print("KERNEL_OK")
</pallas_src>

<mosaic_0001>
module attributes {stable_mosaic.version = 11 : i64} {
  func.func @conv_relu_stats_kernel(%arg0: i32, %arg1: memref<1x16x64xbf16, #tpu.memory_space<vmem>>, %arg2: memref<192x128xbf16, #tpu.memory_space<vmem>>, %arg3: memref<1x128xf32, #tpu.memory_space<vmem>>, %arg4: memref<1x16x128xbf16, #tpu.memory_space<vmem>>, %arg5: memref<1x2x128xf32, #tpu.memory_space<vmem>>, %arg6: memref<18x64xbf16, #tpu.memory_space<vmem>>) attributes {dimension_semantics = [#tpu.dimension_semantics<parallel>], iteration_bounds = array<i64: 2>, scalar_prefetch = 0 : i64, scratch_operands = 1 : i64, tpu.core_type = #tpu.core_type<tc>, window_params = [{transform_indices = @transform_0, window_bounds = array<i64: 1, 16, 64>}, {pipeline_mode = #tpu.pipeline_mode<synchronous>, transform_indices = @transform_1, window_bounds = array<i64: 192, 128>}, {pipeline_mode = #tpu.pipeline_mode<synchronous>, transform_indices = @transform_2, window_bounds = array<i64: 1, 128>}, {transform_indices = @transform_3, window_bounds = array<i64: 1, 16, 128>}, {transform_indices = @transform_4, window_bounds = array<i64: 1, 2, 128>}]} {
    %c0 = arith.constant 0 : index
    %c0_0 = arith.constant 0 : index
    %c0_1 = arith.constant 0 : index
    %0 = vector.load %arg1[%c0, %c0_0, %c0_1] : memref<1x16x64xbf16, #tpu.memory_space<vmem>>, vector<1x16x64xbf16>
    %1 = vector.shape_cast %0 : vector<1x16x64xbf16> to vector<16x64xbf16>
    %cst = arith.constant 0.000000e+00 : bf16
    %2 = vector.broadcast %cst : bf16 to vector<1x64xbf16>
    %c0_2 = arith.constant 0 : index
    %c0_3 = arith.constant 0 : index
    %3 = vector.load %arg6[%c0_2, %c0_3] : memref<18x64xbf16, #tpu.memory_space<vmem>>, vector<1x64xbf16>
    tpu.vector_store %arg6[%c0_2, %c0_3], %2 {strides = array<i32>} : memref<18x64xbf16, #tpu.memory_space<vmem>>, vector<1x64xbf16>,
    %c17 = arith.constant 17 : index
    %c0_4 = arith.constant 0 : index
    %4 = vector.load %arg6[%c17, %c0_4] : memref<18x64xbf16, #tpu.memory_space<vmem>>, vector<1x64xbf16>
    tpu.vector_store %arg6[%c17, %c0_4], %2 {strides = array<i32>} : memref<18x64xbf16, #tpu.memory_space<vmem>>, vector<1x64xbf16>,
    %c1 = arith.constant 1 : index
    %c0_5 = arith.constant 0 : index
    %5 = vector.load %arg6[%c1, %c0_5] : memref<18x64xbf16, #tpu.memory_space<vmem>>, vector<16x64xbf16>
    tpu.vector_store %arg6[%c1, %c0_5], %1 {strides = array<i32>} : memref<18x64xbf16, #tpu.memory_space<vmem>>, vector<16x64xbf16>,
    %c0_6 = arith.constant 0 : index
    %c0_7 = arith.constant 0 : index
    %6 = vector.load %arg6[%c0_6, %c0_7] : memref<18x64xbf16, #tpu.memory_space<vmem>>, vector<16x64xbf16>
    %c2 = arith.constant 2 : index
    %c0_8 = arith.constant 0 : index
    %7 = vector.load %arg6[%c2, %c0_8] : memref<18x64xbf16, #tpu.memory_space<vmem>>, vector<16x64xbf16>
    %8 = tpu.concatenate %6, %1, %7 in 1 : vector<16x64xbf16>, vector<16x64xbf16>, vector<16x64xbf16> -> vector<16x192xbf16>
    %c0_9 = arith.constant 0 : index
    %c0_10 = arith.constant 0 : index
    %9 = vector.load %arg2[%c0_9, %c0_10] : memref<192x128xbf16, #tpu.memory_space<vmem>>, vector<192x128xbf16>
    %cst_11 = arith.constant dense<0.000000e+00> : vector<16x128xf32>
    %10 = tpu.matmul %8, %9, %cst_11 {dimension_numbers = #tpu.dot_dimension_numbers<[1], [0], [0], [1], [0, 0, 1, 1], [], []>} : vector<16x192xbf16>, vector<192x128xbf16>, vector<16x128xf32> -> vector<16x128xf32>
    %c0_12 = arith.constant 0 : index
    %c0_13 = arith.constant 0 : index
    %11 = vector.load %arg3[%c0_12, %c0_13] : memref<1x128xf32, #tpu.memory_space<vmem>>, vector<1x128xf32>
    %12 = vector.broadcast %11 : vector<1x128xf32> to vector<16x128xf32>
    %13 = arith.addf %10, %12 : vector<16x128xf32>
    %cst_14 = arith.constant 0.000000e+00 : f32
    %14 = vector.broadcast %cst_14 : f32 to vector<16x128xf32>
    %15 = arith.maximumf %13, %14 : vector<16x128xf32>
    %16 = vector.shape_cast %15 : vector<16x128xf32> to vector<1x16x128xf32>
    %17 = arith.truncf %16 : vector<1x16x128xf32> to vector<1x16x128xbf16>
    %c0_15 = arith.constant 0 : index
    %c0_16 = arith.constant 0 : index
    %c0_17 = arith.constant 0 : index
    %18 = vector.load %arg4[%c0_15, %c0_16, %c0_17] : memref<1x16x128xbf16, #tpu.memory_space<vmem>>, vector<1x16x128xbf16>
    tpu.vector_store %arg4[%c0_15, %c0_16, %c0_17], %17 {strides = array<i32>} : memref<1x16x128xbf16, #tpu.memory_space<vmem>>, vector<1x16x128xbf16>,
    %cst_18 = arith.constant dense<0.000000e+00> : vector<128xf32>
    %19 = vector.multi_reduction <add>, %15, %cst_18 [0] : vector<16x128xf32> to vector<128xf32>
    %20 = vector.shape_cast %19 : vector<128xf32> to vector<1x128xf32>
    %21 = arith.mulf %15, %15 : vector<16x128xf32>
    %cst_19 = arith.constant dense<0.000000e+00> : vector<128xf32>
    %22 = vector.multi_reduction <add>, %21, %cst_19 [0] : vector<16x128xf32> to vector<128xf32>
    %23 = vector.shape_cast %22 : vector<128xf32> to vector<1x128xf32>
    %24 = tpu.concatenate %20, %23 in 0 : vector<1x128xf32>, vector<1x128xf32> -> vector<2x128xf32>
    %c0_20 = arith.constant 0 : index
    %c0_21 = arith.constant 0 : index
    %c0_22 = arith.constant 0 : index
    %25 = vector.load %arg5[%c0_20, %c0_21, %c0_22] : memref<1x2x128xf32, #tpu.memory_space<vmem>>, vector<1x2x128xf32>
    %26 = vector.shape_cast %25 : vector<1x2x128xf32> to vector<2x128xf32>
    %27 = vector.shape_cast %24 : vector<2x128xf32> to vector<1x2x128xf32>
    tpu.vector_store %arg5[%c0_20, %c0_21, %c0_22], %27 {strides = array<i32>} : memref<1x2x128xf32, #tpu.memory_space<vmem>>, vector<1x2x128xf32>,
    return
  }
  func.func @transform_0(%arg0: i32) -> (i32, i32, i32) {
    %c0_i32 = arith.constant 0 : i32
    %c0_i32_0 = arith.constant 0 : i32
    %c0_i32_1 = arith.constant 0 : i32
    return %arg0, %c0_i32, %c0_i32_0 : i32, i32, i32
  }
  func.func @transform_1(%arg0: i32) -> (i32, i32) {
    %c0_i32 = arith.constant 0 : i32
    %c0_i32_0 = arith.constant 0 : i32
    %c0_i32_1 = arith.constant 0 : i32
    return %c0_i32, %c0_i32_0 : i32, i32
  }
  func.func @transform_2(%arg0: i32) -> (i32, i32) {
    %c0_i32 = arith.constant 0 : i32
    %c0_i32_0 = arith.constant 0 : i32
    %c0_i32_1 = arith.constant 0 : i32
    return %c0_i32, %c0_i32_0 : i32, i32
  }
  func.func @transform_3(%arg0: i32) -> (i32, i32, i32) {
    %c0_i32 = arith.constant 0 : i32
    %c0_i32_0 = arith.constant 0 : i32
    %c0_i32_1 = arith.constant 0 : i32
    return %arg0, %c0_i32, %c0_i32_0 : i32, i32, i32
  }
  func.func @transform_4(%arg0: i32) -> (i32, i32, i32) {
    %c0_i32 = arith.constant 0 : i32
    %c0_i32_0 = arith.constant 0 : i32
    %c0_i32_1 = arith.constant 0 : i32
    return %arg0, %c0_i32, %c0_i32_0 : i32, i32, i32
  }
}

</mosaic_0001>

<llo_original>
// kernel: tile.8
$region0: #{tile.8}
  #allocation0 [shape = 's32[1]{0}', space=sflag, size = 0x4, scoped, tag = 'scoped memory for tile.8']
  %s0 = inlined_call_operand.vmem [shape: f32[8], index: 0, kind: input, shape index: {}]
  %s1 = inlined_call_operand.vmem [shape: f32[16,8], index: 1, kind: output, shape index: {}]
  // Predicated region
  $region2: #{tile.8} parent=0 // pred_check
    _
  $region3: #{tile.8} parent=0 // pred_check_branch
    %3 = sbr.rel (0) target = $region5
  $region4: #{tile.8} parent=0 // pred_region
    _
  $region5: #{tile.8} parent=0 // pred_fallthru
    _
  %v4 = vld [vmem:[%s0] ss:$0 sm:$0xff]
  %5 = vst [vmem:[%s1] sm:$0xff] %v4
  %s6 = scalar_lea.vmem %s1, 8
  %7 = vst [vmem:[%s6] sm:$0xff] %v4

// kernel: tile.9
$region0: #{tile.9}
  %s0 = inlined_call_operand.vmem [shape: f32[16,8], index: 0, kind: input, shape index: {}]
  %s1 = inlined_call_operand.vmem [shape: f32[1,128], index: 1, kind: output, shape index: {}]
  $region1: #{tile.9} parent=0
    #allocation0 [shape = 'u8[4096]{0}', space=vmem, size = 0x1000, scoped, tag = 'scoped mem for output reshape']
    %v2 = vld [vmem:[%s0] sm:$0x1]
    %vm3 = vcmask 64512
    %4 = vst.msk [vmem:[#allocation0] sm:$0x1] %vm3, %v2
    %s5 = scalar_lea.vmem %s0, 15
    %v6 = vld [vmem:[%s5] sm:$0x1]
    %7 = vrot.lane.b32.xlu0 %v6, 120
    %v8 = vpop.permute.xlu0 %7
    %vm9 = vcmask 1048512
    %10 = vst.msk [vmem:[#allocation0] sm:$0x1] %vm9, %v8
    %s11 = scalar_lea.vmem %s0, 14
    %v12 = vld [vmem:[%s11] sm:$0x1]
    %13 = vrot.lane.b32.xlu0 %v12, 112
    %v14 = vpop.permute.xlu0 %13
    %vm15 = vcmask 982912
    %16 = vst.msk [vmem:[#allocation0] sm:$0x1] %vm15, %v14
    %s17 = scalar_lea.vmem %s0, 13
    %v18 = vld [vmem:[%s17] sm:$0x1]
    %19 = vrot.lane.b32.xlu0 %v18, 104
    %v20 = vpop.permute.xlu0 %19
    %vm21 = vcmask 917312
    %22 = vst.msk [vmem:[#allocation0] sm:$0x1] %vm21, %v20
    %s23 = scalar_lea.vmem %s0, 12
    %v24 = vld [vmem:[%s23] sm:$0x1]
    %25 = vrot.lane.b32.xlu0 %v24, 96
    %v26 = vpop.permute.xlu0 %25
    %vm27 = vcmask 851712
    %28 = vst.msk [vmem:[#allocation0] sm:$0x1] %vm27, %v26
    %s29 = scalar_lea.vmem %s0, 11
    %v30 = vld [vmem:[%s29] sm:$0x1]
    %31 = vrot.lane.b32.xlu0 %v30, 88
    %v32 = vpop.permute.xlu0 %31
    %vm33 = vcmask 786112
    %34 = vst.msk [vmem:[#allocation0] sm:$0x1] %vm33, %v32
    %s35 = scalar_lea.vmem %s0, 10
    %v36 = vld [vmem:[%s35] sm:$0x1]
    %37 = vrot.lane.b32.xlu0 %v36, 80
    %v38 = vpop.permute.xlu0 %37
    %vm39 = vcmask 720512
    %40 = vst.msk [vmem:[#allocation0] sm:$0x1] %vm39, %v38
    %s41 = scalar_lea.vmem %s0, 9
    %v42 = vld [vmem:[%s41] sm:$0x1]
    %43 = vrot.lane.b32.xlu0 %v42, 72
    %v44 = vpop.permute.xlu0 %43
    %vm45 = vcmask 654912
    %46 = vst.msk [vmem:[#allocation0] sm:$0x1] %vm45, %v44
    %s47 = scalar_lea.vmem %s0, 8
    %v48 = vld [vmem:[%s47] sm:$0x1]
    %49 = vrot.lane.b32.xlu0 %v48, 64
    %v50 = vpop.permute.xlu0 %49
    %vm51 = vcmask 589312
    %52 = vst.msk [vmem:[#allocation0] sm:$0x1] %vm51, %v50
    %s53 = scalar_lea.vmem %s0, 7
    %v54 = vld [vmem:[%s53] sm:$0x1]
    %55 = vrot.lane.b32.xlu0 %v54, 56
    %v56 = vpop.permute.xlu0 %55
    %vm57 = vcmask 523712
    %58 = vst.msk [vmem:[#allocation0] sm:$0x1] %vm57, %v56
    %s59 = scalar_lea.vmem %s0, 6
    %v60 = vld [vmem:[%s59] sm:$0x1]
    %61 = vrot.lane.b32.xlu0 %v60, 48
    %v62 = vpop.permute.xlu0 %61
    %vm63 = vcmask 458112
    %64 = vst.msk [vmem:[#allocation0] sm:$0x1] %vm63, %v62
    %s65 = scalar_lea.vmem %s0, 5
    %v66 = vld [vmem:[%s65] sm:$0x1]
    %67 = vrot.lane.b32.xlu0 %v66, 40
    %v68 = vpop.permute.xlu0 %67
    %vm69 = vcmask 392512
    %70 = vst.msk [vmem:[#allocation0] sm:$0x1] %vm69, %v68
    %s71 = scalar_lea.vmem %s0, 4
    %v72 = vld [vmem:[%s71] sm:$0x1]
    %73 = vrot.lane.b32.xlu0 %v72, 32
    %v74 = vpop.permute.xlu0 %73
    %vm75 = vcmask 326912
    %76 = vst.msk [vmem:[#allocation0] sm:$0x1] %vm75, %v74
    %s77 = scalar_lea.vmem %s0, 3
    %v78 = vld [vmem:[%s77] sm:$0x1]
    %79 = vrot.lane.b32.xlu0 %v78, 24
    %v80 = vpop.permute.xlu0 %79
    %vm81 = vcmask 261312
    %82 = vst.msk [vmem:[#allocation0] sm:$0x1] %vm81, %v80
    %s83 = scalar_lea.vmem %s0, 2
    %v84 = vld [vmem:[%s83] sm:$0x1]
    %85 = vrot.lane.b32.xlu0 %v84, 16
    %v86 = vpop.permute.xlu0 %85
    %vm87 = vcmask 195712
    %88 = vst.msk [vmem:[#allocation0] sm:$0x1] %vm87, %v86
    %s89 = scalar_lea.vmem %s0, 1
    %v90 = vld [vmem:[%s89] sm:$0x1]
    %91 = vrot.lane.b32.xlu0 %v90, 8
    %v92 = vpop.permute.xlu0 %91
    %vm93 = vcmask 130112
    %94 = vst.msk [vmem:[#allocation0] sm:$0x1] %vm93, %v92
    %s96 = sshll.u32 1, 1
    %s97 = ssub.s32 %s96, 1
    %v99 = vld [vmem:[#allocation0] sm:%s97]
    %s100 = sshll.u32 1, 1
    %s101 = ssub.s32 %s100, 1
    %102 = vst [vmem:[%s1] sm:%s101] %v99

// kernel: conv_block_forward.1
$region0: #{conv_block_forward.1}
  #allocation0 [shape = 'u32[]', space=smem, size = 0x4, offset = 0x4, fixed_abs, tag = 'smem constant byte address 0x4 - core index']
  #allocation1 [shape = 'u32[144,128]{1,0:T(1,128)}', space=vmem, size = 0x12000, scoped, tag = 'internal scratch']
  #allocation2 [shape = 'bf16[18,64]{1,0:T(8,128)(2,1)}', space=vmem, size = 0x1800, scoped, tag = 'scratch operand']
  %s0 = inlined_call_operand.vmem [shape: bf16[2,16,64], index: 0, kind: input, shape index: {}]
  %s1 = inlined_call_operand.vmem [shape: bf16[192,128], index: 1, kind: input, shape index: {}]
  %s2 = inlined_call_operand.vmem [shape: f32[1,128], index: 2, kind: input, shape index: {}]
  %s3 = inlined_call_operand.vmem [shape: bf16[2,16,128], index: 3, kind: output, shape index: {0}]
  %s4 = inlined_call_operand.vmem [shape: f32[2,2,128], index: 4, kind: output, shape index: {1}]
  %5 = xla_tuple %s3, %s4
  %s6 = sld [smem:[#allocation0]]
  $region53: #{conv_block_forward.1} parent=0
    _
  %s8 = ssub.s32 1, %s6
  %s9 = scalar_select 0, %s8, %s6
  loop: start=0, step=1, limit=4
  $region2: #{conv_block_forward.1} parent=0 // loop_pre_header
    _
  $region3: #{conv_block_forward.1} parent=0 // loop_header
    %s11 = sphi 0, %s15
    %p12 = scmp.ge.s32.totalorder %s11, 4
    %s21 = sphi 0, %s23
    %s24 = sphi 0, %s21
    %s25 = sphi 0, %s24
    %s41 = sphi 0, %s25
    %s45 = sphi 0, %s45
    %s47 = sphi 0, %s45
    %s48 = sphi 0, %s47
    %s62 = sphi 0, %s48
    %s66 = sphi 0, %s66
    %s68 = sphi 0, %s66
    %s69 = sphi 0, %s68
    %s83 = sphi 0, %s69
    %s89 = sphi 0, %s91
    %s92 = sphi 0, %s89
    %s93 = sphi 0, %s92
    %s109 = sphi 0, %s93
    %s115 = sphi 0, %s117
    %s118 = sphi 0, %s115
    %s119 = sphi 0, %s118
    %s135 = sphi 0, %s119
  $region4: #{conv_block_forward.1} parent=0 // loop_header_branch
    %14 = sbr.rel (%p12) target = $region8
  $region5: #{conv_block_forward.1} parent=0 // loop_body
    %s16 = ssub.s32 %s11, 1
    %s17 = ssub.s32 %s11, 2
    %s18 = sadd.s32 %s11, 1
    %s19 = ssub.s32 %s11, %s18
    %p20 = scmp.eq.s32.totalorder %s19, 0
    %s22 = sadd.s32 %s21, 1
    %s23 = scalar_select %p20, %s21, %s22
    %p26 = pneg %p20
    %p27 = scmp.eq.s32.totalorder %s11, 1
    %p28 = por %p26, %p27
    %p29 = scmp.ne.s32.totalorder %s21, %s24
    %p30 = scmp.eq.s32.totalorder %s11, 0
    %p31 = por %p29, %p30
    %p32 = scmp.ne.s32.totalorder %s21, %s24
    %p33 = scmp.eq.s32.totalorder %s16, 1
    %p34 = por %p32, %p33
    %p35 = scmp.ne.s32.totalorder %s24, %s25
    %p36 = scmp.eq.s32.totalorder %s16, 0
    %p37 = por %p35, %p36
    %p38 = scmp.ne.s32.totalorder %s24, %s25
    %p39 = scmp.eq.s32.totalorder %s17, 1
    %p40 = por %p38, %p39
    %p42 = scmp.ne.s32.totalorder %s25, %s41
    %p43 = scmp.eq.s32.totalorder %s17, 0
    %p44 = por %p42, %p43
    %s46 = sadd.s32 %s45, 1
    %p49 = scmp.eq.s32.totalorder %s11, 1
    %p50 = scmp.ne.s32.totalorder %s45, %s47
    %p51 = scmp.eq.s32.totalorder %s11, 0
    %p52 = por %p50, %p51
    %p53 = scmp.ne.s32.totalorder %s45, %s47
    %p54 = scmp.eq.s32.totalorder %s16, 1
    %p55 = por %p53, %p54
    %p56 = scmp.ne.s32.totalorder %s47, %s48
    %p57 = scmp.eq.s32.totalorder %s16, 0
    %p58 = por %p56, %p57
    %p59 = scmp.ne.s32.totalorder %s47, %s48
    %p60 = scmp.eq.s32.totalorder %s17, 1
    %p61 = por %p59, %p60
    %p63 = scmp.ne.s32.totalorder %s48, %s62
    %p64 = scmp.eq.s32.totalorder %s17, 0
    %p65 = por %p63, %p64
    %s67 = sadd.s32 %s66, 1
    %p70 = scmp.eq.s32.totalorder %s11, 1
    %p71 = scmp.ne.s32.totalorder %s66, %s68
    %p72 = scmp.eq.s32.totalorder %s11, 0
    %p73 = por %p71, %p72
    %p74 = scmp.ne.s32.totalorder %s66, %s68
    %p75 = scmp.eq.s32.totalorder %s16, 1
    %p76 = por %p74, %p75
    %p77 = scmp.ne.s32.totalorder %s68, %s69
    %p78 = scmp.eq.s32.totalorder %s16, 0
    %p79 = por %p77, %p78
    %p80 = scmp.ne.s32.totalorder %s68, %s69
    %p81 = scmp.eq.s32.totalorder %s17, 1
    %p82 = por %p80, %p81
    %p84 = scmp.ne.s32.totalorder %s69, %s83
    %p85 = scmp.eq.s32.totalorder %s17, 0
    %p86 = por %p84, %p85
    %s87 = ssub.s32 %s11, %s18
    %p88 = scmp.eq.s32.totalorder %s87, 0
    %s90 = sadd.s32 %s89, 1
    %s91 = scalar_select %p88, %s89, %s90
    %p94 = pneg %p88
    %p95 = scmp.eq.s32.totalorder %s11, 1
    %p96 = por %p94, %p95
    %p97 = scmp.ne.s32.totalorder %s89, %s92
    %p98 = scmp.eq.s32.totalorder %s11, 0
    %p99 = por %p97, %p98
    %p100 = scmp.ne.s32.totalorder %s89, %s92
    %p101 = scmp.eq.s32.totalorder %s16, 1
    %p102 = por %p100, %p101
    %p103 = scmp.ne.s32.totalorder %s92, %s93
    %p104 = scmp.eq.s32.totalorder %s16, 0
    %p105 = por %p103, %p104
    %p106 = scmp.ne.s32.totalorder %s92, %s93
    %p107 = scmp.eq.s32.totalorder %s17, 1
    %p108 = por %p106, %p107
    %p110 = scmp.ne.s32.totalorder %s93, %s109
    %p111 = scmp.eq.s32.totalorder %s17, 0
    %p112 = por %p110, %p111
    %s113 = ssub.s32 %s11, %s18
    %p114 = scmp.eq.s32.totalorder %s113, 0
    %s116 = sadd.s32 %s115, 1
    %s117 = scalar_select %p114, %s115, %s116
    %p120 = pneg %p114
    %p121 = scmp.eq.s32.totalorder %s11, 1
    %p122 = por %p120, %p121
    %p123 = scmp.ne.s32.totalorder %s115, %s118
    %p124 = scmp.eq.s32.totalorder %s11, 0
    %p125 = por %p123, %p124
    %p126 = scmp.ne.s32.totalorder %s115, %s118
    %p127 = scmp.eq.s32.totalorder %s16, 1
    %p128 = por %p126, %p127
    %p129 = scmp.ne.s32.totalorder %s118, %s119
    %p130 = scmp.eq.s32.totalorder %s16, 0
    %p131 = por %p129, %p130
    %p132 = scmp.ne.s32.totalorder %s118, %s119
    %p133 = scmp.eq.s32.totalorder %s17, 1
    %p134 = por %p132, %p133
    %p136 = scmp.ne.s32.totalorder %s119, %s135
    %p137 = scmp.eq.s32.totalorder %s17, 0
    %p138 = por %p136, %p137
    %p139 = scmp.le.s32.totalorder 1, %s11
    %p140 = scmp.lt.s32.totalorder %s11, 3
    %p141 = pnand %p139, %p140
    %p142 = pneg %p141
    // Predicated region
    $region9: #{conv_block_forward.1} parent=5 // pred_check
      _
    $region10: #{conv_block_forward.1} parent=5 // pred_check_branch
      %144 = sbr.rel (%p141) target = $region12
    $region11: #{conv_block_forward.1} parent=5 // pred_region
      %s145 = ssub.s32 %s11, 1
      // Predicated region
      $region13: #{conv_block_forward.1} parent=11 // pred_check
        %p146 = pneg %p58
      $region14: #{conv_block_forward.1} parent=11 // pred_check_branch
        %148 = sbr.rel (%p146) target = $region16
      $region15: #{conv_block_forward.1} parent=11 // pred_region
        _
      $region16: #{conv_block_forward.1} parent=11 // pred_fallthru
        _
      // Predicated region
      $region17: #{conv_block_forward.1} parent=11 // pred_check
        %p149 = pneg %p79
      $region18: #{conv_block_forward.1} parent=11 // pred_check_branch
        %151 = sbr.rel (%p149) target = $region20
      $region19: #{conv_block_forward.1} parent=11 // pred_region
        _
      $region20: #{conv_block_forward.1} parent=11 // pred_fallthru
        _
    $region12: #{conv_block_forward.1} parent=5 // pred_fallthru
      _
    %p152 = scmp.lt.s32.totalorder %s11, 2
    // Predicated region
    $region21: #{conv_block_forward.1} parent=5 // pred_check
      %p153 = pneg %p152
    $region22: #{conv_block_forward.1} parent=5 // pred_check_branch
      %155 = sbr.rel (%p153) target = $region24
    $region23: #{conv_block_forward.1} parent=5 // pred_region
      // Predicated region
      $region25: #{conv_block_forward.1} parent=23 // pred_check
        %p156 = pneg %p31
      $region26: #{conv_block_forward.1} parent=23 // pred_check_branch
        %158 = sbr.rel (%p156) target = $region28
      $region27: #{conv_block_forward.1} parent=23 // pred_region
        %p159 = scmp.lt.s32.totalorder %s11, 1
        %s160 = scalar_select %p159, %s11, 1
        %s161 = smul.addr %s160, 2
        %s162 = smul.addr %s161, 4
        %s163 = scalar_lea.vmem %s0, %s162
      $region28: #{conv_block_forward.1} parent=23 // pred_fallthru
        _
    $region24: #{conv_block_forward.1} parent=5 // pred_fallthru
      _
    %p164 = scmp.le.s32.totalorder 1, %s11
    %p165 = scmp.lt.s32.totalorder %s11, 3
    %p166 = pnand %p164, %p165
    %p167 = pneg %p166
    // Predicated region
    $region29: #{conv_block_forward.1} parent=5 // pred_check
      _
    $region30: #{conv_block_forward.1} parent=5 // pred_check_branch
      %169 = sbr.rel (%p166) target = $region32
    $region31: #{conv_block_forward.1} parent=5 // pred_region
      %s170 = ssub.s32 %s11, 1
      %p171 = scmp.lt.s32.totalorder %s16, 1
      %s172 = scalar_select %p171, %s16, 1
      %s173 = smul.addr %s172, 2
      %s174 = smul.addr %s173, 4
      %s175 = scalar_lea.vmem %s0, %s174
      %p176 = pneg %p37
      %p177 = pneg %p34
      %p178 = pneg %p58
      %p179 = pneg %p55
      %p180 = pneg %p79
      %p181 = pneg %p76
      %p182 = pneg %p105
      %p183 = pneg %p102
      %p184 = scmp.lt.s32.totalorder %s16, 1
      %s185 = scalar_select %p184, %s16, 1
      %s186 = smul.addr %s185, 2
      %s187 = smul.addr %s186, 4
      %s188 = scalar_lea.vmem %s3, %s187
      %p189 = pneg %p131
      %p190 = pneg %p128
      %p191 = scmp.lt.s32.totalorder %s16, 1
      %s192 = scalar_select %p191, %s16, 1
      %s193 = smul.addr %s192, 2
      %s194 = scalar_lea.vmem %s4, %s193
      %p195 = scmp.lt.s32.totalorder %s16, 1
      %s196 = scalar_select %p195, %s16, 1
      %s197 = smul.addr %s196, 2
      %s198 = smul.addr %s197, 4
      %s199 = scalar_lea.vmem %s0, %s198
      %p200 = scmp.lt.s32.totalorder %s16, 1
      %s201 = scalar_select %p200, %s16, 1
      %s202 = smul.addr %s201, 2
      %s203 = smul.addr %s202, 4
      %s204 = scalar_lea.vmem %s3, %s203
      %p205 = scmp.lt.s32.totalorder %s16, 1
      %s206 = scalar_select %p205, %s16, 1
      %s207 = smul.addr %s206, 2
      %s208 = scalar_lea.vmem %s4, %s207
      %v210 = vld [vmem:[%s199] sm:$0xf]
      %v211 = vld [vmem:[%s199 + $0x4] sm:$0xf]
      %vm212 = vcmask 516096
      %vm213 = vsmask.f32 256
      %vm214 = vmand %vm212, %vm213
      %v215 = vld [vmem:[#allocation2] sm:$0x1]
      %v216 = vsel %vm214, 0, %v215
      %217 = vst [vmem:[#allocation2] sm:$0x1] %v216
      %vm218 = vsmask.f32 7938
      %vm219 = vmand %vm212, %vm218
      %v220 = vld [vmem:[#allocation2 + $0x8] sm:$0x1]
      %v221 = vsel %vm219, 0, %v220
      %222 = vst [vmem:[#allocation2 + $0x8] sm:$0x1] %v221
      %vm223 = vsmask.f32 4368
      %vm224 = vmor %vm213, %vm223
      %v226 = vshrl.u32 %v210, 16
      %v228 = vrot.slane %v226, 7
      %v229 = vshll.u32 %v210, 16
      %v231 = vor.u32 %v228, %v229
      %v232 = vrot.slane %v228, 4
      %v234 = vshrl.u32 %v211, 16
      %v236 = vrot.slane %v234, 7
      %v237 = vshll.u32 %v211, 16
      %v239 = vor.u32 %v236, %v237
      %v240 = vsel %vm224, %v232, %v239
      %v241 = vrot.slane %v236, 4
      %vm245 = vcmask 519168
      %vm246 = vmand %vm245, %vm218
      %v247 = vld [vmem:[#allocation2] sm:$0xf]
      %v248 = vsel %vm246, %v231, %v247
      %249 = vst [vmem:[#allocation2] sm:$0xf] %v248
      %vm250 = vcmask 519168
      %251 = vst.msk [vmem:[#allocation2 + $0x4] sm:$0xf] %vm250, %v240
      %v252 = vld [vmem:[#allocation2 + $0x8] sm:$0x1]
      %v253 = vsel %vm214, %v241, %v252
      %254 = vst [vmem:[#allocation2 + $0x8] sm:$0x1] %v253
      %v255 = vld [vmem:[#allocation2] sm:$0xf]
      %v256 = vld [vmem:[#allocation2 + $0x4] sm:$0xf]
      %v257 = vld [vmem:[#allocation2] sm:$0xe]
      %v258 = vld [vmem:[#allocation2 + $0x8] sm:$0x1]
      %v261 = vunpack.c.l.b16 %v255
      %v262 = vunpack.c.l.b16 %v256
      %v263 = vpack.c.b16 %v262, %v261
      %v266 = vunpack.c.l.b16 %v210
      %v267 = vunpack.c.l.b16 %v211
      %v268 = vpack.c.b16 %v267, %v266
      %269 = vrot.lane.b32.xlu0 %v268, 64
      %v270 = vpop.permute.xlu0 %269
      %v273 = vunpack.c.l.b16 %v257
      %v274 = vunpack.c.l.b16 %v258
      %v275 = vpack.c.b16 %v262, %v273
      %v276 = vpack.c.b16 %v274, %v274
      %vm277 = vcmask 1046528
      %v278 = vrot.slane %v275, 1
      %v279 = vrot.slane %v276, 1
      %v280 = vsel %vm277, %v278, %v279
      %vm281 = vcmask 523264
      %v284 = vsel %vm281, %v263, %v270
      %v286 = vld [vmem:[%s1] sm:$0xf]
      %v287 = vld [vmem:[%s1 + $0x4] sm:$0xf]
      %v288 = vld [vmem:[%s1 + $0x8] sm:$0xf]
      %v289 = vld [vmem:[%s1 + $0xc] sm:$0xf]
      %v290 = vld [vmem:[%s1 + $0x10] sm:$0xf]
      %v291 = vld [vmem:[%s1 + $0x14] sm:$0xf]
      %v292 = vld [vmem:[%s1 + $0x18] sm:$0xf]
      %v293 = vld [vmem:[%s1 + $0x1c] sm:$0xf]
      %v294 = vld [vmem:[%s1 + $0x20] sm:$0xf]
      %v295 = vld [vmem:[%s1 + $0x24] sm:$0xf]
      %v296 = vld [vmem:[%s1 + $0x28] sm:$0xf]
      %v297 = vld [vmem:[%s1 + $0x2c] sm:$0xf]
      %v298 = vld [vmem:[%s1 + $0x30] sm:$0xf]
      %v299 = vld [vmem:[%s1 + $0x34] sm:$0xf]
      %v300 = vld [vmem:[%s1 + $0x38] sm:$0xf]
      %v301 = vld [vmem:[%s1 + $0x3c] sm:$0xf]
      %v302 = vld [vmem:[%s1 + $0x40] sm:$0xf]
      %v303 = vld [vmem:[%s1 + $0x44] sm:$0xf]
      %v304 = vld [vmem:[%s1 + $0x48] sm:$0xf]
      %v305 = vld [vmem:[%s1 + $0x4c] sm:$0xf]
      %v306 = vld [vmem:[%s1 + $0x50] sm:$0xf]
      %v307 = vld [vmem:[%s1 + $0x54] sm:$0xf]
      %v308 = vld [vmem:[%s1 + $0x58] sm:$0xf]
      %v309 = vld [vmem:[%s1 + $0x5c] sm:$0xf]
      %v310 = vld [vmem:[%s2] sm:$0x1]
      %v312 = vlaneseq
      %v313 = vshrl.u32 %v312, 7
      %v314 = vsub.s32 0, %v313
      %v315 = vrot.slane %v310, %v314
      %v341 = vunpack.c.l.b16 %v286
      %v342 = vunpack.c.l.b16 %v287
      %v343 = vunpack.c.l.b16 %v288
      %v344 = vunpack.c.l.b16 %v289
      %v345 = vunpack.c.l.b16 %v290
      %v346 = vunpack.c.l.b16 %v291
      %v347 = vunpack.c.l.b16 %v292
      %v348 = vunpack.c.l.b16 %v293
      %v349 = vunpack.c.l.b16 %v294
      %v350 = vunpack.c.l.b16 %v295
      %v351 = vunpack.c.l.b16 %v296
      %v352 = vunpack.c.l.b16 %v297
      %v353 = vunpack.c.l.b16 %v298
      %v354 = vunpack.c.l.b16 %v299
      %v355 = vunpack.c.l.b16 %v300
      %v356 = vunpack.c.l.b16 %v301
      %v357 = vunpack.c.l.b16 %v302
      %v358 = vunpack.c.l.b16 %v303
      %v359 = vunpack.c.l.b16 %v304
      %v360 = vunpack.c.l.b16 %v305
      %v361 = vunpack.c.l.b16 %v306
      %v362 = vunpack.c.l.b16 %v307
      %v363 = vunpack.c.l.b16 %v308
      %v364 = vunpack.c.l.b16 %v309
      %v365 = vpack.c.b16 %v342, %v341
      %v366 = vpack.c.b16 %v344, %v343
      %v367 = vpack.c.b16 %v346, %v345
      %v368 = vpack.c.b16 %v348, %v347
      %v369 = vpack.c.b16 %v350, %v349
      %v370 = vpack.c.b16 %v352, %v351
      %v371 = vpack.c.b16 %v354, %v353
      %v372 = vpack.c.b16 %v356, %v355
      %v373 = vpack.c.b16 %v358, %v357
      %v374 = vpack.c.b16 %v360, %v359
      %v375 = vpack.c.b16 %v362, %v361
      %v376 = vpack.c.b16 %v364, %v363
      %v390 = vsel %vm281, %v280, 0
      %392 = vmatprep.subr.bf16.mxu0 0
      %393 = vmatpush1.bf16.msra.mxu0 %v372
      %394 = vmatprep.subr.bf16.mxu0 0
      %395 = vmatpush1.bf16.msra.mxu0 %v371
      %396 = vmatprep.subr.bf16.mxu0 0
      %397 = vmatpush1.bf16.msra.mxu0 %v370
      %398 = vmatprep.subr.bf16.mxu0 0
      %399 = vmatpush1.bf16.msra.mxu0 %v369
      %400 = vmatprep.subr.bf16.mxu0 0
      %401 = vmatpush1.bf16.msra.mxu0 %v368
      %402 = vmatprep.subr.bf16.mxu0 0
      %403 = vmatpush1.bf16.msra.mxu0 %v367
      %404 = vmatprep.subr.bf16.mxu0 0
      %405 = vmatpush1.bf16.msra.mxu0 %v366
      %406 = vmatprep.subr.bf16.mxu0 0
      %407 = vmatpush1.bf16.msra.mxu0 %v365
      %408 = vmatprep.subr.bf16.mxu0 0
      %409 = vmatpush2.bf16.msra.mxu0 0
      %410 = vmatprep.subr.bf16.mxu0 0
      %411 = vmatpush2.bf16.msra.mxu0 0
      %412 = vmatprep.subr.bf16.mxu0 0
      %413 = vmatpush2.bf16.msra.mxu0 0
      %414 = vmatprep.subr.bf16.mxu0 0
      %415 = vmatpush2.bf16.msra.mxu0 0
      %416 = vmatprep.subr.bf16.mxu0 0
      %417 = vmatpush2.bf16.msra.mxu0 %v376
      %418 = vmatprep.subr.bf16.mxu0 0
      %419 = vmatpush2.bf16.msra.mxu0 %v375
      %420 = vmatprep.subr.bf16.mxu0 0
      %421 = vmatpush2.bf16.msra.mxu0 %v374
      %422 = vmatprep.subr.bf16.mxu0 0
      %423 = vmatpush2.bf16.msra.mxu0 %v373
      %424 = vmatprep.mubr.bf16.mxu0 %v390
      %425 = vmatmul.mubr.bf16.gmra.mxu0 %v284
      %v426 = vpop.f32.mrf.mxu0
      %v427 = vadd.f32 %v315, %v426
      %v428 = vpop.f32.mrf.mxu0
      %v429 = vpop.f32.mrf.mxu0
      %v430 = vadd.f32 %v315, %v429
      %v431 = vpop.f32.mrf.mxu0
      %432 = vdwg.mxu0
      %v433 = vmax.f32 %v427, 0.0
      %v434 = vmax.f32 %v430, 0.0
      %v435 = vpack.c.bf16 %v434, %v433
      %v437 = vunpack.c.l.b16 %v435
      %v438 = vunpack.c.h.b16 %v435
      %v439 = vpack.c.b16 %v437, %v437
      %v440 = vpack.c.b16 %v438, %v438
      %443 = vst [vmem:[%s204] sm:$0xf] %v439
      %444 = vst [vmem:[%s204 + $0x4] sm:$0xf] %v440
      %v445 = vadd.f32 %v433, %v434
      %v446 = vrot.slane %v445, 4
      %v447 = vadd.f32 %v445, %v446
      %v448 = vrot.slane %v447, 2
      %v449 = vadd.f32 %v447, %v448
      %v450 = vrot.slane %v449, 1
      %v451 = vadd.f32 %v449, %v450
      %v452 = vmul.f32 %v433, %v433
      %v453 = vmul.f32 %v434, %v434
      %v454 = vadd.f32 %v452, %v453
      %v455 = vrot.slane %v454, 4
      %v456 = vadd.f32 %v454, %v455
      %v457 = vrot.slane %v456, 2
      %v458 = vadd.f32 %v456, %v457
      %v459 = vrot.slane %v458, 1
      %v460 = vadd.f32 %v458, %v459
      %vm461 = vcmask 1040384
      %v462 = vsel %vm461, %v451, %v460
      %463 = vst [vmem:[%s208] sm:$0x3] %v462
      %p464 = scmp.lt.s32.totalorder %s16, 1
      %s465 = scalar_select %p464, %s16, 1
      %s466 = smul.addr %s465, 2
      %s467 = smul.addr %s466, 4
      %s468 = scalar_lea.vmem %s3, %s467
      %p469 = scmp.lt.s32.totalorder %s16, 1
      %s470 = scalar_select %p469, %s16, 1
      %s471 = smul.addr %s470, 2
      %s472 = scalar_lea.vmem %s4, %s471
      // Predicated region
      $region33: #{conv_block_forward.1} parent=31 // pred_check
        %p473 = pneg %p102
      $region34: #{conv_block_forward.1} parent=31 // pred_check_branch
        %475 = sbr.rel (%p473) target = $region36
      $region35: #{conv_block_forward.1} parent=31 // pred_region
        _
      $region36: #{conv_block_forward.1} parent=31 // pred_fallthru
        _
      // Predicated region
      $region37: #{conv_block_forward.1} parent=31 // pred_check
        %p476 = pneg %p128
      $region38: #{conv_block_forward.1} parent=31 // pred_check_branch
        %478 = sbr.rel (%p476) target = $region40
      $region39: #{conv_block_forward.1} parent=31 // pred_region
        _
      $region40: #{conv_block_forward.1} parent=31 // pred_fallthru
        _
    $region32: #{conv_block_forward.1} parent=5 // pred_fallthru
      _
    %p479 = scmp.le.s32.totalorder 2, %s11
    // Predicated region
    $region41: #{conv_block_forward.1} parent=5 // pred_check
      %p480 = pneg %p479
    $region42: #{conv_block_forward.1} parent=5 // pred_check_branch
      %482 = sbr.rel (%p480) target = $region44
    $region43: #{conv_block_forward.1} parent=5 // pred_region
      %s483 = ssub.s32 %s11, 2
      // Predicated region
      $region45: #{conv_block_forward.1} parent=43 // pred_check
        %p484 = pneg %p108
      $region46: #{conv_block_forward.1} parent=43 // pred_check_branch
        %486 = sbr.rel (%p484) target = $region48
      $region47: #{conv_block_forward.1} parent=43 // pred_region
        %p487 = scmp.lt.s32.totalorder %s17, 1
        %s488 = scalar_select %p487, %s17, 1
        %s489 = smul.addr %s488, 2
        %s490 = smul.addr %s489, 4
        %s491 = scalar_lea.vmem %s3, %s490
      $region48: #{conv_block_forward.1} parent=43 // pred_fallthru
        _
      // Predicated region
      $region49: #{conv_block_forward.1} parent=43 // pred_check
        %p492 = pneg %p134
      $region50: #{conv_block_forward.1} parent=43 // pred_check_branch
        %494 = sbr.rel (%p492) target = $region52
      $region51: #{conv_block_forward.1} parent=43 // pred_region
        %p495 = scmp.lt.s32.totalorder %s17, 1
        %s496 = scalar_select %p495, %s17, 1
        %s497 = smul.addr %s496, 2
        %s498 = scalar_lea.vmem %s4, %s497
      $region52: #{conv_block_forward.1} parent=43 // pred_fallthru
        _
    $region44: #{conv_block_forward.1} parent=5 // pred_fallthru
      _
  $region6: #{conv_block_forward.1} parent=0 // loop_footer
    %s15 = sadd.s32 1, %s11
  $region7: #{conv_block_forward.1} parent=0 // loop_footer_branch
    %10 = sbr.rel target = $region3
  $region8: #{conv_block_forward.1} parent=0 // loop_exit
    _

</llo_original>
